<compile_context>
chip_gen: v7x
topology: tpu7x:2x2x1
jax: 0.10.0
libtpu: 0.0.40
codegen_flags: <defaults>
</compile_context>

<pallas_src>
import jax
import jax.numpy as jnp
from jax.experimental import pallas as pl
from jax.experimental.pallas import tpu as pltpu

# Module hyper-parameters (conv1d_channels=[16,32], conv1d_kws=[input_dim,5])
INPUT_DIM = 4            # input_dim
K = 16                   # k (sort-pool size)
C1, C2 = 16, 32          # conv1d_channels
KW2 = 5                  # conv1d_kws[1]
LP = K // 2              # length after MaxPool1d(2,2)  == int((k-2)/2 + 1)
L2 = LP - KW2 + 1        # length after conv1d_p2
DENSE_DIM = L2 * C2      # == self.dense_dim (128)
HALF = LP * C1           # 128: lane offset separating even/odd pooling partners


def _readout_kernel(x_ref, w1_ref, b1_ref, w2_ref, b2_ref, o_ref):
    x = x_ref[...]                                                     # [TB, K*D] bf16
    # conv1d_p1 (kernel=stride=D) + ReLU as ONE bf16 matmul with block-diag
    # weight, f32 accumulation.
    c1 = jnp.dot(x, w1_ref[...], preferred_element_type=jnp.float32) + b1_ref[...]
    c1 = jnp.maximum(c1, 0.0)                                          # [TB, 256] f32
    # MaxPool1d(2,2): partners are 128 lanes apart (by weight-column permutation)
    p = jnp.maximum(c1[:, :HALF], c1[:, HALF:])                        # [TB, 128] f32
    # conv1d_p2 (kernel=5, stride=1) + ReLU as ONE bf16 matmul with the 5-tap
    # window folded into the expanded weight; result is already in torch's
    # conv2.view(B,-1) order.  Only the dot operand is cast to bf16.
    out = jnp.dot(p.astype(w2_ref.dtype), w2_ref[...],
                  preferred_element_type=jnp.float32) + b2_ref[...]
    o_ref[...] = jnp.maximum(out, 0.0).astype(o_ref.dtype)             # [TB, 128]


def _round_up(x, m):
    return (x + m - 1) // m * m


def _expand_conv1_weight(w1, b1):
    """w1: [D, C1] (w1[d,c] = torch_weight[c,0,d]); b1: [C1].

    Builds W1e [K*D, K*C1] block-diagonal, with columns permuted so that
    c1[:, u*C1+c]       = conv1 output at time 2u   (even steps -> lanes [0,128))
    c1[:, 128+u*C1+c]   = conv1 output at time 2u+1 (odd  steps -> lanes [128,256))
    """
    W1e = jnp.zeros((K * INPUT_DIM, K * C1), jnp.float32)
    for t in range(K):
        col0 = (t // 2) * C1 + (t % 2) * HALF
        W1e = W1e.at[t * INPUT_DIM:(t + 1) * INPUT_DIM, col0:col0 + C1].set(w1)
    b1e = jnp.tile(b1.reshape(1, C1), (1, K))          # bias independent of t
    return W1e.astype(jnp.bfloat16), b1e.astype(jnp.float32)


def _expand_conv2_weight(w2_torch, b2):
    """w2_torch: [C2, C1, KW2] (torch Conv1d layout); b2: [C2].

    Builds W2e [LP*C1, L2*C2] so that for pooled p with p[:, s*C1+i] = pooled[s, i]:
        (p @ W2e)[:, c2*L2 + t] = sum_{j,i} pooled[t+j, i] * w2_torch[c2, i, j]
    i.e. the output columns are already in torch's conv2.view(B,-1) order.
    """
    W2e = jnp.zeros((LP * C1, L2 * C2), jnp.float32)
    for t in range(L2):
        for j in range(KW2):
            s = t + j
            W2e = W2e.at[s * C1:(s + 1) * C1, t::L2].set(w2_torch[:, :, j].T)
    b2e = jnp.repeat(b2.reshape(C2), L2).reshape(1, L2 * C2)
    return W2e.astype(jnp.bfloat16), b2e.astype(jnp.float32)


def conv1d_readout_pallas(re, w1, b1, w2_torch, b2, *, tb=None,
                          out_dtype=jnp.float32):
    """re: [B, K, D] sort-pooled features.
    Returns [B, C2*L2] matching torch F.relu(conv2.view(batch_size, -1))."""
    B = re.shape[0]
    # Contiguous reshape + bf16 cast (MXU-native dtype; halves input DMA bytes).
    x2 = re.reshape(B, K * INPUT_DIM).astype(jnp.bfloat16)
    W1e, b1e = _expand_conv1_weight(w1, b1)
    W2e, b2e = _expand_conv2_weight(w2_torch, b2)

    if tb is None:
        # Target ~8 grid steps so v7x (2 TCs) gets >=2 pipelined steps/core and
        # single-TC v5e/v6e gets >=3; cap at 2048 rows (double-buffered blocks
        # [tb,64]bf16 + [tb,128]f32 stay far below scoped VMEM everywhere).
        tb = min(2048, max(8, _round_up(pl.cdiv(B, 8), 8)))
    # Never let a single block exceed the batch; when clamped, block == full
    # array extent which is always a legal block shape.
    tb = max(1, min(tb, B))
    grid_b = pl.cdiv(B, tb)
    # Ragged last block (B % tb != 0) is handled by Pallas boundary masking:
    # out-of-bounds input rows read garbage, out-of-bounds output rows are
    # dropped — no wrapper-side pad or trailing slice (no extra HBM passes).

    out = pl.pallas_call(
        _readout_kernel,
        out_shape=jax.ShapeDtypeStruct((B, DENSE_DIM), out_dtype),
        grid_spec=pltpu.PrefetchScalarGridSpec(
            num_scalar_prefetch=0,
            grid=(grid_b,),
            in_specs=[
                pl.BlockSpec((tb, K * INPUT_DIM), lambda i: (i, 0)),
                pl.BlockSpec((K * INPUT_DIM, K * C1), lambda i: (0, 0)),
                pl.BlockSpec((1, K * C1), lambda i: (0, 0)),
                pl.BlockSpec((LP * C1, DENSE_DIM), lambda i: (0, 0)),
                pl.BlockSpec((1, DENSE_DIM), lambda i: (0, 0)),
            ],
            out_specs=pl.BlockSpec((tb, DENSE_DIM), lambda i: (i, 0)),
        ),
        compiler_params=pltpu.CompilerParams(dimension_semantics=("parallel",)),
    )(x2, W1e, b1e, W2e, b2e)
    return out


def global_sort_pool(x, batch, k):
    """Plain-JAX glue reproducing torch_geometric.nn.global_sort_pool semantics.
    Returns [B, k, D]."""
    # TODO(synk): data-dependent per-graph sort/gather kept in plain JAX glue
    # (scatter + argsort), not inside the Pallas kernel.
    N, D = x.shape
    num_graphs = int(batch.max()) + 1
    fill = x.min() - 1.0
    counts = jnp.bincount(batch, length=num_graphs)
    starts = jnp.concatenate(
        [jnp.zeros((1,), counts.dtype), jnp.cumsum(counts)[:-1]])
    pos = jnp.arange(N) - starts[batch]
    max_nodes = int(counts.max())
    dense = jnp.full((num_graphs, max_nodes, D), fill, dtype=x.dtype)
    dense = dense.at[batch, pos].set(x)
    order = jnp.argsort(-dense[:, :, -1], axis=1)
    dense = jnp.take_along_axis(dense, order[:, :, None], axis=1)
    if max_nodes >= k:
        dense = dense[:, :k]
    else:
        pad = jnp.full((num_graphs, k - max_nodes, D), fill, dtype=x.dtype)
        dense = jnp.concatenate([dense, pad], axis=1)
    dense = jnp.where(dense == fill, jnp.zeros_like(dense), dense)
    return dense


def _reference_readout(re, w1, b1, w2_torch, b2):
    """Plain-JAX (f32) reimplementation of the torch forward (correctness check)."""
    B = re.shape[0]
    out1 = jax.nn.relu(jnp.einsum('gtd,dc->gtc', re, w1) + b1.reshape(1, 1, C1))
    pooled = jnp.max(out1.reshape(B, LP, 2, C1), axis=2)          # [B, LP, C1]
    cols = []
    for t in range(L2):
        win = pooled[:, t:t + KW2, :]                             # [B, KW2, C1]
        cols.append(jnp.einsum('gji,cij->gc', win, w2_torch) + b2.reshape(1, C2))
    out2 = jax.nn.relu(jnp.stack(cols, axis=-1))                  # [B, C2, L2]
    return out2.reshape(B, C2 * L2)


if __name__ == "__main__":
    key = jax.random.PRNGKey(0)
    k1, k2, k3, k4, k5 = jax.random.split(key, 5)

    # Graph batch: 2 graphs with 20 and 12 nodes (12 < k exercises zero-padding)
    n0, n1 = 20, 12
    N = n0 + n1
    x = jax.random.normal(k1, (N, INPUT_DIM), dtype=jnp.float32)
    batch = jnp.concatenate(
        [jnp.zeros((n0,), jnp.int32), jnp.ones((n1,), jnp.int32)])

    # Parameters (shapes per nn.Conv1d in __init__)
    # conv1d_p1: torch weight [C1, 1, D] -> matmul layout [D, C1]; bias [C1]
    w1 = jax.random.normal(k2, (INPUT_DIM, C1), dtype=jnp.float32) * 0.1
    b1 = jax.random.normal(k3, (C1,), dtype=jnp.float32) * 0.1
    # conv1d_p2: torch weight [C2, C1, KW2]; bias [C2]
    w2_torch = jax.random.normal(k4, (C2, C1, KW2), dtype=jnp.float32) * 0.1
    b2 = jax.random.normal(k5, (C2,), dtype=jnp.float32) * 0.1

    re = global_sort_pool(x, batch, K)                     # [B, K, D]
    out = conv1d_readout_pallas(re, w1, b1, w2_torch, b2)  # [B, dense_dim]
    jax.block_until_ready(out)
    assert out.shape == (2, DENSE_DIM), out.shape

    ref = _reference_readout(re, w1, b1, w2_torch, b2)
    # Tolerance loosened vs f32 reference because matmul operands are bf16.
    assert jnp.allclose(out, ref, atol=3e-2, rtol=3e-2), \
        float(jnp.max(jnp.abs(out - ref)))

    print("KERNEL_OK")
</pallas_src>

<mosaic_0001>
module attributes {stable_mosaic.version = 11 : i64} {
  func.func @_readout_kernel(%arg0: i32, %arg1: memref<2x64xbf16, #tpu.memory_space<vmem>>, %arg2: memref<64x256xbf16, #tpu.memory_space<vmem>>, %arg3: memref<1x256xf32, #tpu.memory_space<vmem>>, %arg4: memref<128x128xbf16, #tpu.memory_space<vmem>>, %arg5: memref<1x128xf32, #tpu.memory_space<vmem>>, %arg6: memref<2x128xf32, #tpu.memory_space<vmem>>) attributes {dimension_semantics = [#tpu.dimension_semantics<parallel>], iteration_bounds = array<i64: 1>, scalar_prefetch = 0 : i64, scratch_operands = 0 : i64, tpu.core_type = #tpu.core_type<tc>, window_params = [{transform_indices = @transform_0, window_bounds = array<i64: 2, 64>}, {pipeline_mode = #tpu.pipeline_mode<synchronous>, transform_indices = @transform_1, window_bounds = array<i64: 64, 256>}, {pipeline_mode = #tpu.pipeline_mode<synchronous>, transform_indices = @transform_2, window_bounds = array<i64: 1, 256>}, {pipeline_mode = #tpu.pipeline_mode<synchronous>, transform_indices = @transform_3, window_bounds = array<i64: 128, 128>}, {pipeline_mode = #tpu.pipeline_mode<synchronous>, transform_indices = @transform_4, window_bounds = array<i64: 1, 128>}, {transform_indices = @transform_5, window_bounds = array<i64: 2, 128>}]} {
    %c0 = arith.constant 0 : index
    %c0_0 = arith.constant 0 : index
    %0 = vector.load %arg1[%c0, %c0_0] : memref<2x64xbf16, #tpu.memory_space<vmem>>, vector<2x64xbf16>
    %c0_1 = arith.constant 0 : index
    %c0_2 = arith.constant 0 : index
    %1 = vector.load %arg2[%c0_1, %c0_2] : memref<64x256xbf16, #tpu.memory_space<vmem>>, vector<64x256xbf16>
    %cst = arith.constant dense<0.000000e+00> : vector<2x256xf32>
    %2 = tpu.matmul %0, %1, %cst {dimension_numbers = #tpu.dot_dimension_numbers<[1], [0], [0], [1], [0, 0, 1, 1], [], []>} : vector<2x64xbf16>, vector<64x256xbf16>, vector<2x256xf32> -> vector<2x256xf32>
    %c0_3 = arith.constant 0 : index
    %c0_4 = arith.constant 0 : index
    %3 = vector.load %arg3[%c0_3, %c0_4] : memref<1x256xf32, #tpu.memory_space<vmem>>, vector<1x256xf32>
    %4 = vector.broadcast %3 : vector<1x256xf32> to vector<2x256xf32>
    %5 = arith.addf %2, %4 : vector<2x256xf32>
    %cst_5 = arith.constant 0.000000e+00 : f32
    %6 = vector.broadcast %cst_5 : f32 to vector<2x256xf32>
    %7 = arith.maximumf %5, %6 : vector<2x256xf32>
    %8 = vector.extract_strided_slice %7 {offsets = [0, 0], sizes = [2, 128], strides = [1, 1]} : vector<2x256xf32> to vector<2x128xf32>
    %9 = vector.extract_strided_slice %7 {offsets = [0, 128], sizes = [2, 128], strides = [1, 1]} : vector<2x256xf32> to vector<2x128xf32>
    %10 = arith.maximumf %8, %9 : vector<2x128xf32>
    %11 = arith.truncf %10 : vector<2x128xf32> to vector<2x128xbf16>
    %c0_6 = arith.constant 0 : index
    %c0_7 = arith.constant 0 : index
    %12 = vector.load %arg4[%c0_6, %c0_7] : memref<128x128xbf16, #tpu.memory_space<vmem>>, vector<128x128xbf16>
    %cst_8 = arith.constant dense<0.000000e+00> : vector<2x128xf32>
    %13 = tpu.matmul %11, %12, %cst_8 {dimension_numbers = #tpu.dot_dimension_numbers<[1], [0], [0], [1], [0, 0, 1, 1], [], []>} : vector<2x128xbf16>, vector<128x128xbf16>, vector<2x128xf32> -> vector<2x128xf32>
    %c0_9 = arith.constant 0 : index
    %c0_10 = arith.constant 0 : index
    %14 = vector.load %arg5[%c0_9, %c0_10] : memref<1x128xf32, #tpu.memory_space<vmem>>, vector<1x128xf32>
    %15 = vector.broadcast %14 : vector<1x128xf32> to vector<2x128xf32>
    %16 = arith.addf %13, %15 : vector<2x128xf32>
    %cst_11 = arith.constant 0.000000e+00 : f32
    %17 = vector.broadcast %cst_11 : f32 to vector<2x128xf32>
    %18 = arith.maximumf %16, %17 : vector<2x128xf32>
    %c0_12 = arith.constant 0 : index
    %c0_13 = arith.constant 0 : index
    %19 = vector.load %arg6[%c0_12, %c0_13] : memref<2x128xf32, #tpu.memory_space<vmem>>, vector<2x128xf32>
    tpu.vector_store %arg6[%c0_12, %c0_13], %18 {strides = array<i32>} : memref<2x128xf32, #tpu.memory_space<vmem>>, vector<2x128xf32>,
    return
  }
  func.func @transform_0(%arg0: i32) -> (i32, i32) {
    %c0_i32 = arith.constant 0 : i32
    %c0_i32_0 = arith.constant 0 : i32
    return %arg0, %c0_i32 : i32, i32
  }
  func.func @transform_1(%arg0: i32) -> (i32, i32) {
    %c0_i32 = arith.constant 0 : i32
    %c0_i32_0 = arith.constant 0 : i32
    %c0_i32_1 = arith.constant 0 : i32
    return %c0_i32, %c0_i32_0 : i32, i32
  }
  func.func @transform_2(%arg0: i32) -> (i32, i32) {
    %c0_i32 = arith.constant 0 : i32
    %c0_i32_0 = arith.constant 0 : i32
    %c0_i32_1 = arith.constant 0 : i32
    return %c0_i32, %c0_i32_0 : i32, i32
  }
  func.func @transform_3(%arg0: i32) -> (i32, i32) {
    %c0_i32 = arith.constant 0 : i32
    %c0_i32_0 = arith.constant 0 : i32
    %c0_i32_1 = arith.constant 0 : i32
    return %c0_i32, %c0_i32_0 : i32, i32
  }
  func.func @transform_4(%arg0: i32) -> (i32, i32) {
    %c0_i32 = arith.constant 0 : i32
    %c0_i32_0 = arith.constant 0 : i32
    %c0_i32_1 = arith.constant 0 : i32
    return %c0_i32, %c0_i32_0 : i32, i32
  }
  func.func @transform_5(%arg0: i32) -> (i32, i32) {
    %c0_i32 = arith.constant 0 : i32
    %c0_i32_0 = arith.constant 0 : i32
    return %arg0, %c0_i32 : i32, i32
  }
}

</mosaic_0001>

<llo_original>
// kernel: tpu_custom_call.1
$region0: #{tpu_custom_call.1}
  #allocation0 [shape = 'u32[]', space=smem, size = 0x4, offset = 0x4, fixed_abs, tag = 'smem constant byte address 0x4 - core index']
  #allocation1 [shape = 'u32[144,128]{1,0:T(1,128)}', space=vmem, size = 0x12000, scoped, tag = 'internal scratch']
  %s0 = inlined_call_operand.hbm [shape: bf16[2,64], index: 0, kind: input, shape index: {}]
  %s1 = inlined_call_operand.hbm [shape: bf16[64,256], index: 1, kind: input, shape index: {}]
  %s2 = inlined_call_operand.vmem [shape: f32[1,256], index: 2, kind: input, shape index: {}]
  %s3 = inlined_call_operand.hbm [shape: bf16[128,128], index: 3, kind: input, shape index: {}]
  %s4 = inlined_call_operand.vmem [shape: f32[1,128], index: 4, kind: input, shape index: {}]
  %s5 = inlined_call_operand.hbm [shape: f32[2,128], index: 5, kind: output, shape index: {}]
  %s6 = sld [smem:[#allocation0]]
  $region42: #{tpu_custom_call.1} parent=0
    _
  %s8 = ssub.s32 1, %s6
  %s9 = scalar_select 0, %s8, %s6
  $region1: #{tpu_custom_call.1} parent=0
    #allocation2 [shape = 'u8[512]{0}', space=vmem, size = 0x400, scoped, tag = 'input window, operand 0, single buffered']
    #allocation3 [shape = 's32[1]{0}', space=sflag, size = 0x4, scoped, tag = 'scoped memory for tpu_custom_call.1']
    #allocation4 [shape = 's32[1]{0}', space=sflag, size = 0x4, scoped, tag = 'scoped memory for tpu_custom_call.1']
    #allocation5 [shape = 'u8[32768]{0}', space=vmem, size = 0x8000, scoped, tag = 'input window, operand 1, single buffered']
    #allocation6 [shape = 's32[1]{0}', space=sflag, size = 0x4, scoped, tag = 'scoped memory for tpu_custom_call.1']
    #allocation7 [shape = 'u8[32768]{0}', space=vmem, size = 0x8000, scoped, tag = 'input window, operand 3, single buffered']
    #allocation8 [shape = 'u8[1024]{0}', space=vmem, size = 0x400, scoped, tag = 'output window, operand 0, single buffered']
    %10 = vsyncpa [#allocation3], 0
    %11 = vsyncpa [#allocation6], 0
    %12 = vsyncpa [#allocation4], 0
    // Predicated region
    $region2: #{tpu_custom_call.1} parent=1 // pred_check
      _
    $region3: #{tpu_custom_call.1} parent=1 // pred_check_branch
      %14 = sbr.rel (0) target = $region5
    $region4: #{tpu_custom_call.1} parent=1 // pred_region
      %s16 = ssub.s32 16, 16
      %17 = vsyncadd [#allocation3], %s16
      %s19 = sshll.u32 [#allocation2], 4
      %s20 = int_to_ptr.vmem [resolvable:$true] %s19
      %22 = dma.hbm_to_vmem [thread:$0]  %s0, 16, %s20, [#allocation3]
    $region5: #{tpu_custom_call.1} parent=1 // pred_fallthru
      _
    // Predicated region
    $region6: #{tpu_custom_call.1} parent=1 // pred_check
      _
    $region7: #{tpu_custom_call.1} parent=1 // pred_check_branch
      %24 = sbr.rel (0) target = $region9
    $region8: #{tpu_custom_call.1} parent=1 // pred_region
      %s26 = ssub.s32 1024, 1024
      %27 = vsyncadd [#allocation6], %s26
      %s28 = sshll.u32 [#allocation5], 4
      %s29 = int_to_ptr.vmem [resolvable:$true] %s28
      %34 = dma.hbm_to_vmem [thread:$0]  %s1, 1024, %s29, [#allocation6], 128, 128, 8
    $region9: #{tpu_custom_call.1} parent=1 // pred_fallthru
      _
    // Predicated region
    $region10: #{tpu_custom_call.1} parent=1 // pred_check
      _
    $region11: #{tpu_custom_call.1} parent=1 // pred_check_branch
      %36 = sbr.rel (0) target = $region13
    $region12: #{tpu_custom_call.1} parent=1 // pred_region
      _
    $region13: #{tpu_custom_call.1} parent=1 // pred_fallthru
      _
    // Predicated region
    $region14: #{tpu_custom_call.1} parent=1 // pred_check
      _
    $region15: #{tpu_custom_call.1} parent=1 // pred_check_branch
      %38 = sbr.rel (0) target = $region17
    $region16: #{tpu_custom_call.1} parent=1 // pred_region
      %s40 = ssub.s32 1024, 1024
      %41 = vsyncadd [#allocation6], %s40
      %s42 = sshll.u32 [#allocation7], 4
      %s43 = int_to_ptr.vmem [resolvable:$true] %s42
      %48 = dma.hbm_to_vmem [thread:$0]  %s3, 1024, %s43, [#allocation6], 64, 64, 4
    $region17: #{tpu_custom_call.1} parent=1 // pred_fallthru
      _
    // Predicated region
    $region18: #{tpu_custom_call.1} parent=1 // pred_check
      _
    $region19: #{tpu_custom_call.1} parent=1 // pred_check_branch
      %50 = sbr.rel (0) target = $region21
    $region20: #{tpu_custom_call.1} parent=1 // pred_region
      _
    $region21: #{tpu_custom_call.1} parent=1 // pred_fallthru
      _
    // Predicated region
    $region22: #{tpu_custom_call.1} parent=1 // pred_check
      _
    $region23: #{tpu_custom_call.1} parent=1 // pred_check_branch
      %52 = sbr.rel (0) target = $region25
    $region24: #{tpu_custom_call.1} parent=1 // pred_region
      %53 = dma.done [#allocation3], 16
    $region25: #{tpu_custom_call.1} parent=1 // pred_fallthru
      _
    // Predicated region
    $region26: #{tpu_custom_call.1} parent=1 // pred_check
      _
    $region27: #{tpu_custom_call.1} parent=1 // pred_check_branch
      %55 = sbr.rel (0) target = $region29
    $region28: #{tpu_custom_call.1} parent=1 // pred_region
      %56 = dma.done [#allocation6], 1024
    $region29: #{tpu_custom_call.1} parent=1 // pred_fallthru
      _
    // Predicated region
    $region30: #{tpu_custom_call.1} parent=1 // pred_check
      _
    $region31: #{tpu_custom_call.1} parent=1 // pred_check_branch
      %58 = sbr.rel (0) target = $region33
    $region32: #{tpu_custom_call.1} parent=1 // pred_region
      %59 = dma.done [#allocation6], 1024
    $region33: #{tpu_custom_call.1} parent=1 // pred_fallthru
      _
    %v61 = vld [vmem:[#allocation2] sm:$0x1]
    %v62 = vld [vmem:[#allocation5] sm:$0xff]
    %v63 = vld [vmem:[#allocation5 + $0x8] sm:$0xff]
    %v64 = vld [vmem:[#allocation5 + $0x10] sm:$0xff]
    %v65 = vld [vmem:[#allocation5 + $0x18] sm:$0xff]
    %v66 = vld [vmem:[#allocation5 + $0x20] sm:$0xff]
    %v67 = vld [vmem:[#allocation5 + $0x28] sm:$0xff]
    %v68 = vld [vmem:[#allocation5 + $0x30] sm:$0xff]
    %v69 = vld [vmem:[#allocation5 + $0x38] sm:$0xff]
    %v70 = vld [vmem:[%s2] sm:$0x3]
    %v72 = vlaneseq
    %v73 = vshrl.u32 %v72, 7
    %v74 = vsub.s32 0, %v73
    %v75 = vrot.slane %v70, %v74
    %v76 = vlaneseq
    %v77 = vshrl.u32 %v76, 7
    %v78 = vsub.s32 1, %v77
    %v79 = vrot.slane %v70, %v78
    %v90 = vunpack.c.l.b16 %v62
    %v91 = vunpack.c.h.b16 %v62
    %v92 = vunpack.c.l.b16 %v63
    %v93 = vunpack.c.h.b16 %v63
    %v94 = vunpack.c.l.b16 %v64
    %v95 = vunpack.c.h.b16 %v64
    %v96 = vunpack.c.l.b16 %v65
    %v97 = vunpack.c.h.b16 %v65
    %v98 = vunpack.c.l.b16 %v66
    %v99 = vunpack.c.h.b16 %v66
    %v100 = vunpack.c.l.b16 %v67
    %v101 = vunpack.c.h.b16 %v67
    %v102 = vunpack.c.l.b16 %v68
    %v103 = vunpack.c.h.b16 %v68
    %v104 = vunpack.c.l.b16 %v69
    %v105 = vunpack.c.h.b16 %v69
    %v106 = vpack.c.b16 %v92, %v90
    %v107 = vpack.c.b16 %v93, %v91
    %v108 = vpack.c.b16 %v96, %v94
    %v109 = vpack.c.b16 %v97, %v95
    %v110 = vpack.c.b16 %v100, %v98
    %v111 = vpack.c.b16 %v101, %v99
    %v112 = vpack.c.b16 %v104, %v102
    %v113 = vpack.c.b16 %v105, %v103
    %vm122 = vcmask 523264
    %v124 = vsel %vm122, %v61, 0
    %126 = vmatprep.subr.bf16.mxu0 %v107
    %127 = vmatpush1.bf16.msra.mxu0 %v106
    %128 = vmatprep.subr.bf16.mxu0 %v109
    %129 = vmatpush1.bf16.msra.mxu0 %v108
    %130 = vmatprep.subr.bf16.mxu0 %v111
    %131 = vmatpush1.bf16.msra.mxu0 %v110
    %132 = vmatprep.subr.bf16.mxu0 %v113
    %133 = vmatpush1.bf16.msra.mxu0 %v112
    %134 = vmatprep.subr.bf16.mxu0 0
    %135 = vmatpush1.bf16.msra.mxu0 0
    %136 = vmatprep.subr.bf16.mxu0 0
    %137 = vmatpush1.bf16.msra.mxu0 0
    %138 = vmatprep.subr.bf16.mxu0 0
    %139 = vmatpush1.bf16.msra.mxu0 0
    %140 = vmatprep.subr.bf16.mxu0 0
    %141 = vmatpush1.bf16.msra.mxu0 0
    %142 = vmatprep.subr.bf16.mxu0 0
    %143 = vmatpush1.bf16.msra.mxu0 0
    %144 = vmatprep.subr.bf16.mxu0 0
    %145 = vmatpush1.bf16.msra.mxu0 0
    %146 = vmatprep.subr.bf16.mxu0 0
    %147 = vmatpush1.bf16.msra.mxu0 0
    %148 = vmatprep.subr.bf16.mxu0 0
    %149 = vmatpush1.bf16.msra.mxu0 0
    %150 = vmatprep.subr.bf16.mxu0 0
    %151 = vmatpush1.bf16.msra.mxu0 0
    %152 = vmatprep.subr.bf16.mxu0 0
    %153 = vmatpush1.bf16.msra.mxu0 0
    %154 = vmatprep.subr.bf16.mxu0 0
    %155 = vmatpush1.bf16.msra.mxu0 0
    %156 = vmatprep.subr.bf16.mxu0 0
    %157 = vmatpush1.bf16.msra.mxu0 0
    %158 = vmatprep.mubr.bf16.mxu0 0
    %159 = vmatmul.mubr.bf16.gmra.mrb[0].mxu0 %v124
    %v160 = vpop.f32.mrb[0].mxu0
    %v161 = vadd.f32 %v75, %v160
    %v162 = vpop.f32.mrb[0].mxu0
    %v163 = vadd.f32 %v79, %v162
    %v164 = vpop.f32.mrb[0].mxu0
    %v165 = vpop.f32.mrb[0].mxu0
    %166 = vdwg.mxu0
    %v167 = vmax.f32 %v161, 0.0
    %v168 = vmax.f32 %v163, 0.0
    %v169 = vmax.f32 %v167, %v168
    %v170 = vpack.c.bf16 %v169, %v169
    %v171 = vld [vmem:[#allocation7] sm:$0xf]
    %v172 = vld [vmem:[#allocation7 + $0x4] sm:$0xf]
    %v173 = vld [vmem:[#allocation7 + $0x8] sm:$0xf]
    %v174 = vld [vmem:[#allocation7 + $0xc] sm:$0xf]
    %v175 = vld [vmem:[#allocation7 + $0x10] sm:$0xf]
    %v176 = vld [vmem:[#allocation7 + $0x14] sm:$0xf]
    %v177 = vld [vmem:[#allocation7 + $0x18] sm:$0xf]
    %v178 = vld [vmem:[#allocation7 + $0x1c] sm:$0xf]
    %v179 = vld [vmem:[#allocation7 + $0x20] sm:$0xf]
    %v180 = vld [vmem:[#allocation7 + $0x24] sm:$0xf]
    %v181 = vld [vmem:[#allocation7 + $0x28] sm:$0xf]
    %v182 = vld [vmem:[#allocation7 + $0x2c] sm:$0xf]
    %v183 = vld [vmem:[#allocation7 + $0x30] sm:$0xf]
    %v184 = vld [vmem:[#allocation7 + $0x34] sm:$0xf]
    %v185 = vld [vmem:[#allocation7 + $0x38] sm:$0xf]
    %v186 = vld [vmem:[#allocation7 + $0x3c] sm:$0xf]
    %v187 = vld [vmem:[%s4] sm:$0x1]
    %v189 = vlaneseq
    %v190 = vshrl.u32 %v189, 7
    %v191 = vsub.s32 0, %v190
    %v192 = vrot.slane %v187, %v191
    %v210 = vunpack.c.l.b16 %v171
    %v211 = vunpack.c.l.b16 %v172
    %v212 = vunpack.c.l.b16 %v173
    %v213 = vunpack.c.l.b16 %v174
    %v214 = vunpack.c.l.b16 %v175
    %v215 = vunpack.c.l.b16 %v176
    %v216 = vunpack.c.l.b16 %v177
    %v217 = vunpack.c.l.b16 %v178
    %v218 = vunpack.c.l.b16 %v179
    %v219 = vunpack.c.l.b16 %v180
    %v220 = vunpack.c.l.b16 %v181
    %v221 = vunpack.c.l.b16 %v182
    %v222 = vunpack.c.l.b16 %v183
    %v223 = vunpack.c.l.b16 %v184
    %v224 = vunpack.c.l.b16 %v185
    %v225 = vunpack.c.l.b16 %v186
    %v226 = vpack.c.b16 %v211, %v210
    %v227 = vpack.c.b16 %v213, %v212
    %v228 = vpack.c.b16 %v215, %v214
    %v229 = vpack.c.b16 %v217, %v216
    %v230 = vpack.c.b16 %v219, %v218
    %v231 = vpack.c.b16 %v221, %v220
    %v232 = vpack.c.b16 %v223, %v222
    %v233 = vpack.c.b16 %v225, %v224
    %242 = vmatprep.subr.bf16.mxu0 0
    %243 = vmatpush1.bf16.msra.mxu0 %v226
    %244 = vmatprep.subr.bf16.mxu0 0
    %245 = vmatpush1.bf16.msra.mxu0 %v227
    %246 = vmatprep.subr.bf16.mxu0 0
    %247 = vmatpush1.bf16.msra.mxu0 %v228
    %248 = vmatprep.subr.bf16.mxu0 0
    %249 = vmatpush1.bf16.msra.mxu0 %v229
    %250 = vmatprep.subr.bf16.mxu0 0
    %251 = vmatpush1.bf16.msra.mxu0 %v230
    %252 = vmatprep.subr.bf16.mxu0 0
    %253 = vmatpush1.bf16.msra.mxu0 %v231
    %254 = vmatprep.subr.bf16.mxu0 0
    %255 = vmatpush1.bf16.msra.mxu0 %v232
    %256 = vmatprep.subr.bf16.mxu0 0
    %257 = vmatpush1.bf16.msra.mxu0 %v233
    %258 = vmatprep.subr.bf16.mxu0 0
    %259 = vmatpush1.bf16.msra.mxu0 0
    %260 = vmatprep.subr.bf16.mxu0 0
    %261 = vmatpush1.bf16.msra.mxu0 0
    %262 = vmatprep.subr.bf16.mxu0 0
    %263 = vmatpush1.bf16.msra.mxu0 0
    %264 = vmatprep.subr.bf16.mxu0 0
    %265 = vmatpush1.bf16.msra.mxu0 0
    %266 = vmatprep.subr.bf16.mxu0 0
    %267 = vmatpush1.bf16.msra.mxu0 0
    %268 = vmatprep.subr.bf16.mxu0 0
    %269 = vmatpush1.bf16.msra.mxu0 0
    %270 = vmatprep.subr.bf16.mxu0 0
    %271 = vmatpush1.bf16.msra.mxu0 0
    %272 = vmatprep.subr.bf16.mxu0 0
    %273 = vmatpush1.bf16.msra.mxu0 0
    %274 = vmatprep.mubr.bf16.mxu0 0
    %275 = vmatmul.mubr.bf16.gmra.mrb[0].mxu0 %v170
    %v276 = vpop.f32.mrb[0].mxu0
    %v277 = vadd.f32 %v192, %v276
    %v278 = vpop.f32.mrb[0].mxu0
    %v279 = vpop.f32.mrb[0].mxu0
    %v280 = vpop.f32.mrb[0].mxu0
    %281 = vdwg.mxu0
    %v282 = vmax.f32 %v277, 0.0
    %283 = vst [vmem:[#allocation8] sm:$0x3] %v282
    // Predicated region
    $region34: #{tpu_custom_call.1} parent=1 // pred_check
      _
    $region35: #{tpu_custom_call.1} parent=1 // pred_check_branch
      %285 = sbr.rel (0) target = $region37
    $region36: #{tpu_custom_call.1} parent=1 // pred_region
      %s287 = ssub.s32 32, 32
      %288 = vsyncadd [#allocation4], %s287
      %s290 = sshll.u32 [#allocation8], 4
      %s291 = int_to_ptr.vmem [resolvable:$true] %s290
      %293 = dma.vmem_to_hbm [thread:$0]  %s291, 32, %s5, [#allocation4]
    $region37: #{tpu_custom_call.1} parent=1 // pred_fallthru
      _
    // Predicated region
    $region38: #{tpu_custom_call.1} parent=1 // pred_check
      _
    $region39: #{tpu_custom_call.1} parent=1 // pred_check_branch
      %295 = sbr.rel (0) target = $region41
    $region40: #{tpu_custom_call.1} parent=1 // pred_region
      %296 = dma.done [#allocation4], 32
    $region41: #{tpu_custom_call.1} parent=1 // pred_fallthru
      _
    %297 = vsyncpa [#allocation3], 1
    %298 = vsyncpa [#allocation6], 1
    %299 = vsyncpa [#allocation4], 1

</llo_original>
